<compile_context>
chip_gen: v7x
topology: tpu7x:2x2x1
jax: 0.10.0
libtpu: 0.0.40
codegen_flags: <defaults>
</compile_context>

<pallas_src>
import jax
import jax.numpy as jnp
from jax.experimental import pallas as pl
from jax.experimental.pallas import tpu as pltpu


def fused_affine_kernel(x_ref, w_ref, b_ref, o_ref):
    """One MXU matmul + f32 bias add per batch tile; everything VMEM-resident."""
    w = w_ref[...]
    # In-kernel cast only (no wrapper-side HBM pass); no-op when both are f32.
    x = x_ref[...].astype(w.dtype)
    y = jnp.dot(x, w, preferred_element_type=jnp.float32)
    o_ref[...] = (y + b_ref[...]).astype(o_ref.dtype)


def _choose_block_rows(p, desired):
    """Pick a packed-row tile: multiple of 8 (or full extent), >=2 grid steps when possible."""
    if p <= 8:
        return p                      # single block equal to the full extent (always legal)
    t = min(desired, (p + 1) // 2)    # keep >=2 grid steps so v7x's 2 TCs both get work
    t = max(8, (t // 8) * 8)          # multiple of 8 sublanes
    return min(t, p)


def simple_model_forward(x, w1, b1, w2, b2, *, tile_rows=65536, pack=128,
                         weights_dtype=None):
    """x: [B, 10], w1: [10, 20], b1: [1, 20], w2: [20, 5], b2: [1, 5] -> [B, 5] (f32).

    tile_rows:     target number of ORIGINAL batch rows per grid step.
    pack:          max block-diagonal packing factor (power of two). 128 makes the
                   lane axes exact multiples of 128; cap at 32-64 (or use bf16
                   weights) on v5e if the f32 MXU becomes the bottleneck.
    weights_dtype: optional dtype (e.g. jnp.bfloat16) for the fused weight; the x
                   tile is cast in-kernel, accumulation and output stay f32.
    """
    # --- host-side algebraic fusion of the two linears (no nonlinearity between) ---
    w = jnp.dot(w1, w2, preferred_element_type=jnp.float32)        # [10, 5]
    bias = jnp.dot(b1, w2, preferred_element_type=jnp.float32) + b2  # [1, 5]
    if weights_dtype is not None:
        w = w.astype(weights_dtype)
    bias = bias.astype(jnp.float32)   # bias added post-accumulation in f32

    B, K = x.shape
    N = w.shape[1]

    # --- lane-dense block-diagonal packing factor: largest pow2 divisor of B, <= pack ---
    r = 1
    while r < pack and B % (2 * r) == 0:
        r *= 2

    P = B // r                # packed rows
    Kp, Np = K * r, N * r     # packed lane widths (1280 / 640 when r == 128)

    xp = x.reshape(P, Kp)                               # contiguous view, no HBM copy
    wp = jnp.kron(jnp.eye(r, dtype=w.dtype), w)         # [Kp, Np] block-diagonal weight
    bp = jnp.tile(bias, (1, r))                         # [1, Np] tiled bias (f32)

    tm = _choose_block_rows(P, max(1, tile_rows // r))  # packed rows per grid step
    grid = (pl.cdiv(P, tm),)                            # boundary-clipped; no host pad

    # Size scoped VMEM from the actual double-buffered footprint (+ headroom).
    bytes_tiles = tm * Kp * x.dtype.itemsize + tm * Np * 4
    bytes_consts = Kp * Np * wp.dtype.itemsize + Np * 4
    vmem_need = 2 * (bytes_tiles + bytes_consts)
    vmem_limit = int(min(max(vmem_need * 3 // 2, 32 * 1024 * 1024), 64 * 1024 * 1024))

    out = pl.pallas_call(
        fused_affine_kernel,
        out_shape=jax.ShapeDtypeStruct((P, Np), jnp.float32),
        grid_spec=pltpu.PrefetchScalarGridSpec(
            num_scalar_prefetch=0,
            grid=grid,
            in_specs=[
                # x tile marches down the (packed) batch axis; weight & bias blocks
                # have constant index maps -> stay VMEM-resident across iterations.
                pl.BlockSpec((tm, Kp), lambda i: (i, 0)),
                pl.BlockSpec((Kp, Np), lambda i: (0, 0)),
                pl.BlockSpec((1, Np), lambda i: (0, 0)),
            ],
            out_specs=pl.BlockSpec((tm, Np), lambda i: (i, 0)),
        ),
        compiler_params=pltpu.CompilerParams(
            dimension_semantics=("parallel",),   # lets v7x split the batch across 2 TCs
            vmem_limit_bytes=vmem_limit,
        ),
    )(xp, wp, bp)

    return out.reshape(B, N)                            # contiguous view, no HBM copy


def init_params(key):
    """Deterministic parameter init matching the PyTorch module's shapes.

    PyTorch nn.Linear(in, out) stores weight [out, in]; we store the transpose
    [in, out]. Uses the same uniform(-1/sqrt(fan_in), 1/sqrt(fan_in)) scheme.
    """
    k1, k2, k3, k4, k5, k6 = jax.random.split(key, 6)

    def u(k, shape, fan_in):
        bound = 1.0 / jnp.sqrt(fan_in)
        return jax.random.uniform(k, shape, jnp.float32, -bound, bound)

    w1 = u(k1, (10, 20), 10.0)        # linear1: in=10, out=20
    b1 = u(k2, (1, 20), 10.0)
    w2 = u(k3, (20, 5), 20.0)         # linear2: in=20, out=5
    b2 = u(k4, (1, 5), 20.0)
    # conv: nn.Conv2d(3, 6, 3) -- present in the module but never used by forward();
    # initialized only for shape parity.
    conv_w = u(k5, (6, 3, 3, 3), 27.0)
    conv_b = u(k6, (6,), 27.0)
    return w1, b1, w2, b2, conv_w, conv_b


def reference_forward(x, w1, b1, w2, b2):
    # Un-fused reference (matches the PyTorch module op-for-op).
    h = x @ w1 + b1
    return h @ w2 + b2


if __name__ == "__main__":
    key = jax.random.PRNGKey(0)
    kp, kx1, kx2, kx3 = jax.random.split(key, 4)
    w1, b1, w2, b2, _conv_w, _conv_b = init_params(kp)

    # --- test 1: small batch (single packed row, single grid step), f32 ---
    x1 = jax.random.normal(kx1, (16, 10), jnp.float32)
    o1 = jax.block_until_ready(simple_model_forward(x1, w1, b1, w2, b2))
    r1 = reference_forward(x1, w1, b1, w2, b2)
    assert o1.shape == (16, 5), o1.shape
    assert jnp.allclose(o1, r1, atol=1e-5, rtol=1e-5), "f32 small-batch mismatch"

    # --- test 2: B = 2688 = 21*128 -> fully lane-dense (r=128), multi-step grid with a
    #     boundary-clipped final block (no host pad / output slice), f32 ---
    x2 = jax.random.normal(kx2, (2688, 10), jnp.float32)
    o2 = jax.block_until_ready(simple_model_forward(x2, w1, b1, w2, b2, tile_rows=1024))
    r2 = reference_forward(x2, w1, b1, w2, b2)
    assert o2.shape == (2688, 5), o2.shape
    assert jnp.allclose(o2, r2, atol=1e-5, rtol=1e-5), "f32 packed-path mismatch"

    # --- test 3: bf16 fused weight (v5e MXU lever); x is cast in-kernel only ---
    o3 = jax.block_until_ready(
        simple_model_forward(x2, w1, b1, w2, b2, tile_rows=1024,
                             weights_dtype=jnp.bfloat16))
    assert jnp.allclose(o3, r2, atol=5e-2, rtol=5e-2), "bf16 weight path mismatch"

    # --- test 4: odd batch (no pow-2 packing) -> r=1 fallback layout, still no pad/slice ---
    x3 = jax.random.normal(kx3, (1001, 10), jnp.float32)
    o4 = jax.block_until_ready(simple_model_forward(x3, w1, b1, w2, b2))
    r4 = reference_forward(x3, w1, b1, w2, b2)
    assert o4.shape == (1001, 5), o4.shape
    assert jnp.allclose(o4, r4, atol=1e-5, rtol=1e-5), "f32 fallback-path mismatch"

    print("KERNEL_OK")
</pallas_src>

<mosaic_0001>
module attributes {stable_mosaic.version = 11 : i64} {
  func.func @fused_affine_kernel(%arg0: i32, %arg1: memref<1x160xf32, #tpu.memory_space<vmem>>, %arg2: memref<160x80xf32, #tpu.memory_space<vmem>>, %arg3: memref<1x80xf32, #tpu.memory_space<vmem>>, %arg4: memref<1x80xf32, #tpu.memory_space<vmem>>) attributes {dimension_semantics = [#tpu.dimension_semantics<parallel>], iteration_bounds = array<i64: 1>, scalar_prefetch = 0 : i64, scratch_operands = 0 : i64, tpu.core_type = #tpu.core_type<tc>, window_params = [{transform_indices = @transform_0, window_bounds = array<i64: 1, 160>}, {pipeline_mode = #tpu.pipeline_mode<synchronous>, transform_indices = @transform_1, window_bounds = array<i64: 160, 80>}, {pipeline_mode = #tpu.pipeline_mode<synchronous>, transform_indices = @transform_2, window_bounds = array<i64: 1, 80>}, {transform_indices = @transform_3, window_bounds = array<i64: 1, 80>}]} {
    %c0 = arith.constant 0 : index
    %c0_0 = arith.constant 0 : index
    %0 = vector.load %arg2[%c0, %c0_0] : memref<160x80xf32, #tpu.memory_space<vmem>>, vector<160x80xf32>
    %c0_1 = arith.constant 0 : index
    %c0_2 = arith.constant 0 : index
    %1 = vector.load %arg1[%c0_1, %c0_2] : memref<1x160xf32, #tpu.memory_space<vmem>>, vector<1x160xf32>
    %cst = arith.constant dense<0.000000e+00> : vector<1x80xf32>
    %2 = tpu.matmul %1, %0, %cst {dimension_numbers = #tpu.dot_dimension_numbers<[1], [0], [0], [1], [0, 0, 1, 1], [], []>} : vector<1x160xf32>, vector<160x80xf32>, vector<1x80xf32> -> vector<1x80xf32>
    %c0_3 = arith.constant 0 : index
    %c0_4 = arith.constant 0 : index
    %3 = vector.load %arg3[%c0_3, %c0_4] : memref<1x80xf32, #tpu.memory_space<vmem>>, vector<1x80xf32>
    %4 = arith.addf %2, %3 : vector<1x80xf32>
    %c0_5 = arith.constant 0 : index
    %c0_6 = arith.constant 0 : index
    %5 = vector.load %arg4[%c0_5, %c0_6] : memref<1x80xf32, #tpu.memory_space<vmem>>, vector<1x80xf32>
    tpu.vector_store %arg4[%c0_5, %c0_6], %4 {strides = array<i32>} : memref<1x80xf32, #tpu.memory_space<vmem>>, vector<1x80xf32>,
    return
  }
  func.func @transform_0(%arg0: i32) -> (i32, i32) {
    %c0_i32 = arith.constant 0 : i32
    %c0_i32_0 = arith.constant 0 : i32
    return %arg0, %c0_i32 : i32, i32
  }
  func.func @transform_1(%arg0: i32) -> (i32, i32) {
    %c0_i32 = arith.constant 0 : i32
    %c0_i32_0 = arith.constant 0 : i32
    %c0_i32_1 = arith.constant 0 : i32
    return %c0_i32, %c0_i32_0 : i32, i32
  }
  func.func @transform_2(%arg0: i32) -> (i32, i32) {
    %c0_i32 = arith.constant 0 : i32
    %c0_i32_0 = arith.constant 0 : i32
    %c0_i32_1 = arith.constant 0 : i32
    return %c0_i32, %c0_i32_0 : i32, i32
  }
  func.func @transform_3(%arg0: i32) -> (i32, i32) {
    %c0_i32 = arith.constant 0 : i32
    %c0_i32_0 = arith.constant 0 : i32
    return %arg0, %c0_i32 : i32, i32
  }
}

</mosaic_0001>

<llo_original>
// kernel: tpu_custom_call.1
$region0: #{tpu_custom_call.1}
  #allocation0 [shape = 'u32[]', space=smem, size = 0x4, offset = 0x4, fixed_abs, tag = 'smem constant byte address 0x4 - core index']
  #allocation1 [shape = 'u32[144,128]{1,0:T(1,128)}', space=vmem, size = 0x12000, scoped, tag = 'internal scratch']
  %s0 = inlined_call_operand.hbm [shape: f32[1,160], index: 0, kind: input, shape index: {}]
  %s1 = inlined_call_operand.hbm [shape: f32[160,80], index: 1, kind: input, shape index: {}]
  %s2 = inlined_call_operand.vmem [shape: f32[1,80], index: 2, kind: input, shape index: {}]
  %s3 = inlined_call_operand.hbm [shape: f32[1,80], index: 3, kind: output, shape index: {}]
  %s4 = sld [smem:[#allocation0]]
  $region30: #{tpu_custom_call.1} parent=0
    _
  %s6 = ssub.s32 1, %s4
  %s7 = scalar_select 0, %s6, %s4
  $region1: #{tpu_custom_call.1} parent=0
    #allocation2 [shape = 'u8[1024]{0}', space=vmem, size = 0x400, scoped, tag = 'input window, operand 0, single buffered']
    #allocation3 [shape = 's32[1]{0}', space=sflag, size = 0x4, scoped, tag = 'scoped memory for tpu_custom_call.1']
    #allocation4 [shape = 's32[1]{0}', space=sflag, size = 0x4, scoped, tag = 'scoped memory for tpu_custom_call.1']
    #allocation5 [shape = 'u8[81920]{0}', space=vmem, size = 0x14000, scoped, tag = 'input window, operand 1, single buffered']
    #allocation6 [shape = 's32[1]{0}', space=sflag, size = 0x4, scoped, tag = 'scoped memory for tpu_custom_call.1']
    #allocation7 [shape = 'u8[512]{0}', space=vmem, size = 0x400, scoped, tag = 'output window, operand 0, single buffered']
    %8 = vsyncpa [#allocation3], 0
    %9 = vsyncpa [#allocation6], 0
    %10 = vsyncpa [#allocation4], 0
    // Predicated region
    $region2: #{tpu_custom_call.1} parent=1 // pred_check
      _
    $region3: #{tpu_custom_call.1} parent=1 // pred_check_branch
      %12 = sbr.rel (0) target = $region5
    $region4: #{tpu_custom_call.1} parent=1 // pred_region
      %s14 = ssub.s32 32, 32
      %15 = vsyncadd [#allocation3], %s14
      %s17 = sshll.u32 [#allocation2], 4
      %s18 = int_to_ptr.vmem [resolvable:$true] %s17
      %20 = dma.hbm_to_vmem [thread:$0]  %s0, 32, %s18, [#allocation3]
    $region5: #{tpu_custom_call.1} parent=1 // pred_fallthru
      _
    // Predicated region
    $region6: #{tpu_custom_call.1} parent=1 // pred_check
      _
    $region7: #{tpu_custom_call.1} parent=1 // pred_check_branch
      %22 = sbr.rel (0) target = $region9
    $region8: #{tpu_custom_call.1} parent=1 // pred_region
      %s24 = ssub.s32 2560, 2560
      %25 = vsyncadd [#allocation6], %s24
      %s26 = sshll.u32 [#allocation5], 4
      %s27 = int_to_ptr.vmem [resolvable:$true] %s26
      %32 = dma.hbm_to_vmem [thread:$0]  %s1, 2560, %s27, [#allocation6], 128, 128, 8
    $region9: #{tpu_custom_call.1} parent=1 // pred_fallthru
      _
    // Predicated region
    $region10: #{tpu_custom_call.1} parent=1 // pred_check
      _
    $region11: #{tpu_custom_call.1} parent=1 // pred_check_branch
      %34 = sbr.rel (0) target = $region13
    $region12: #{tpu_custom_call.1} parent=1 // pred_region
      _
    $region13: #{tpu_custom_call.1} parent=1 // pred_fallthru
      _
    // Predicated region
    $region14: #{tpu_custom_call.1} parent=1 // pred_check
      _
    $region15: #{tpu_custom_call.1} parent=1 // pred_check_branch
      %36 = sbr.rel (0) target = $region17
    $region16: #{tpu_custom_call.1} parent=1 // pred_region
      %37 = dma.done [#allocation3], 32
    $region17: #{tpu_custom_call.1} parent=1 // pred_fallthru
      _
    // Predicated region
    $region18: #{tpu_custom_call.1} parent=1 // pred_check
      _
    $region19: #{tpu_custom_call.1} parent=1 // pred_check_branch
      %39 = sbr.rel (0) target = $region21
    $region20: #{tpu_custom_call.1} parent=1 // pred_region
      %40 = dma.done [#allocation6], 2560
    $region21: #{tpu_custom_call.1} parent=1 // pred_fallthru
      _
    %v41 = vld [vmem:[#allocation5] sm:$0xff]
    %v42 = vld [vmem:[#allocation5 + $0x8] sm:$0xff]
    %v43 = vld [vmem:[#allocation5 + $0x10] sm:$0xff]
    %v44 = vld [vmem:[#allocation5 + $0x18] sm:$0xff]
    %v45 = vld [vmem:[#allocation5 + $0x20] sm:$0xff]
    %v46 = vld [vmem:[#allocation5 + $0x28] sm:$0xff]
    %v47 = vld [vmem:[#allocation5 + $0x30] sm:$0xff]
    %v48 = vld [vmem:[#allocation5 + $0x38] sm:$0xff]
    %v49 = vld [vmem:[#allocation5 + $0x40] sm:$0xff]
    %v50 = vld [vmem:[#allocation5 + $0x48] sm:$0xff]
    %v51 = vld [vmem:[#allocation5 + $0x50] sm:$0xff]
    %v52 = vld [vmem:[#allocation5 + $0x58] sm:$0xff]
    %v53 = vld [vmem:[#allocation5 + $0x60] sm:$0xff]
    %v54 = vld [vmem:[#allocation5 + $0x68] sm:$0xff]
    %v55 = vld [vmem:[#allocation5 + $0x70] sm:$0xff]
    %v56 = vld [vmem:[#allocation5 + $0x78] sm:$0xff]
    %v57 = vld [vmem:[#allocation5 + $0x80] sm:$0xff]
    %v58 = vld [vmem:[#allocation5 + $0x88] sm:$0xff]
    %v59 = vld [vmem:[#allocation5 + $0x90] sm:$0xff]
    %v60 = vld [vmem:[#allocation5 + $0x98] sm:$0xff]
    %v61 = vld [vmem:[#allocation2] sm:$0x3]
    %v62 = vld [vmem:[%s2] sm:$0x1]
    %v64 = vlaneseq
    %v65 = vshrl.u32 %v64, 7
    %v66 = vsub.s32 0, %v65
    %v67 = vrot.slane %v61, %v66
    %v68 = vlaneseq
    %v69 = vshrl.u32 %v68, 7
    %v70 = vsub.s32 1, %v69
    %v71 = vrot.slane %v61, %v70
    %vm73 = vcmask 261120
    %v74 = vsel %vm73, %v71, 0
    %76 = vmatprep.subr.mxu0 0.0
    %77 = vmatpush1.msra.mxu0 %v41
    %78 = vmatprep.subr.mxu0 0.0
    %79 = vmatpush1.msra.mxu0 %v42
    %80 = vmatprep.subr.mxu0 0.0
    %81 = vmatpush1.msra.mxu0 %v43
    %82 = vmatprep.subr.mxu0 0.0
    %83 = vmatpush1.msra.mxu0 %v44
    %84 = vmatprep.subr.mxu0 0.0
    %85 = vmatpush1.msra.mxu0 %v45
    %86 = vmatprep.subr.mxu0 0.0
    %87 = vmatpush1.msra.mxu0 %v46
    %88 = vmatprep.subr.mxu0 0.0
    %89 = vmatpush1.msra.mxu0 %v47
    %90 = vmatprep.subr.mxu0 0.0
    %91 = vmatpush1.msra.mxu0 %v48
    %92 = vmatprep.subr.mxu0 0.0
    %93 = vmatpush1.msra.mxu0 %v49
    %94 = vmatprep.subr.mxu0 0.0
    %95 = vmatpush1.msra.mxu0 %v50
    %96 = vmatprep.subr.mxu0 0.0
    %97 = vmatpush1.msra.mxu0 %v51
    %98 = vmatprep.subr.mxu0 0.0
    %99 = vmatpush1.msra.mxu0 %v52
    %100 = vmatprep.subr.mxu0 0.0
    %101 = vmatpush1.msra.mxu0 %v53
    %102 = vmatprep.subr.mxu0 0.0
    %103 = vmatpush1.msra.mxu0 %v54
    %104 = vmatprep.subr.mxu0 0.0
    %105 = vmatpush1.msra.mxu0 %v55
    %106 = vmatprep.subr.mxu0 0.0
    %107 = vmatpush1.msra.mxu0 %v56
    %108 = vmatprep.subr.mxu0 0.0
    %109 = vmatpush1.msra.mxu0 %v57
    %110 = vmatprep.subr.mxu0 0.0
    %111 = vmatpush1.msra.mxu0 %v58
    %112 = vmatprep.subr.mxu0 0.0
    %113 = vmatpush1.msra.mxu0 %v59
    %114 = vmatprep.subr.mxu0 0.0
    %115 = vmatpush1.msra.mxu0 %v60
    %116 = vmatprep.subr.mxu0 0.0
    %117 = vmatpush1.msra.mxu0 0.0
    %118 = vmatprep.subr.mxu0 0.0
    %119 = vmatpush1.msra.mxu0 0.0
    %120 = vmatprep.subr.mxu0 0.0
    %121 = vmatpush1.msra.mxu0 0.0
    %122 = vmatprep.subr.mxu0 0.0
    %123 = vmatpush1.msra.mxu0 0.0
    %124 = vmatprep.subr.mxu0 0.0
    %125 = vmatpush1.msra.mxu0 0.0
    %126 = vmatprep.subr.mxu0 0.0
    %127 = vmatpush1.msra.mxu0 0.0
    %128 = vmatprep.subr.mxu0 0.0
    %129 = vmatpush1.msra.mxu0 0.0
    %130 = vmatprep.subr.mxu0 0.0
    %131 = vmatpush1.msra.mxu0 0.0
    %132 = vmatprep.subr.mxu0 0.0
    %133 = vmatpush1.msra.mxu0 0.0
    %134 = vmatprep.subr.mxu0 0.0
    %135 = vmatpush1.msra.mxu0 0.0
    %136 = vmatprep.subr.mxu0 0.0
    %137 = vmatpush1.msra.mxu0 0.0
    %138 = vmatprep.subr.mxu0 0.0
    %139 = vmatpush1.msra.mxu0 0.0
    %140 = vmatprep.mubr.f32.mxu0 %v74
    %141 = vmatmul.mubr.f32.gmra.mrb[0].mxu0 %v67
    %v142 = vpop.f32.mrb[0].mxu0
    %v143 = vadd.f32 %v62, %v142
    %v144 = vpop.f32.mrb[0].mxu0
    %145 = vdwg.mxu0
    %vm146 = vcmask 647168
    %147 = vst.msk [vmem:[#allocation7] sm:$0x1] %vm146, %v143
    // Predicated region
    $region22: #{tpu_custom_call.1} parent=1 // pred_check
      _
    $region23: #{tpu_custom_call.1} parent=1 // pred_check_branch
      %149 = sbr.rel (0) target = $region25
    $region24: #{tpu_custom_call.1} parent=1 // pred_region
      %s151 = ssub.s32 16, 16
      %152 = vsyncadd [#allocation4], %s151
      %s154 = sshll.u32 [#allocation7], 4
      %s155 = int_to_ptr.vmem [resolvable:$true] %s154
      %157 = dma.vmem_to_hbm [thread:$0]  %s155, 16, %s3, [#allocation4]
    $region25: #{tpu_custom_call.1} parent=1 // pred_fallthru
      _
    // Predicated region
    $region26: #{tpu_custom_call.1} parent=1 // pred_check
      _
    $region27: #{tpu_custom_call.1} parent=1 // pred_check_branch
      %159 = sbr.rel (0) target = $region29
    $region28: #{tpu_custom_call.1} parent=1 // pred_region
      %160 = dma.done [#allocation4], 16
    $region29: #{tpu_custom_call.1} parent=1 // pred_fallthru
      _
    %161 = vsyncpa [#allocation3], 1
    %162 = vsyncpa [#allocation6], 1
    %163 = vsyncpa [#allocation4], 1

</llo_original>
